<compile_context>
chip_gen: v6e
topology: v6e:2x2x1
jax: 0.10.0
libtpu: 0.0.40
codegen_flags: <defaults>
</compile_context>

<pallas_src>
import jax
import jax.numpy as jnp
from jax.experimental import pallas as pl
from jax.experimental.pallas import tpu as pltpu


_SQRT_2_OVER_PI = 0.7978845608028654
_GELU_C = 0.044715


def _gelu_tanh(x):
    # GELU, tanh approximation (matches torch.nn.GELU(approximate='tanh')),
    # factored as x*(0.5 + 0.5*tanh(k*x*(1 + c*x^2))) to reuse x^2.
    x2 = x * x
    inner = _SQRT_2_OVER_PI * x * (1.0 + _GELU_C * x2)
    return x * (0.5 + 0.5 * jnp.tanh(inner))


# ----------------------------- kernels -----------------------------

def _mlp_resident_kernel(x_ref, wfc_ref, bfc_ref, wproj_ref, bproj_ref, o_ref):
    """Weights fully VMEM-resident; 1-D grid over token tiles."""
    # (tm, C) @ (C, H) -> f32 accumulation on the MXU.
    h = jnp.dot(x_ref[...], wfc_ref[...], preferred_element_type=jnp.float32)
    # Bias + GELU in the compute dtype (bf16 on v6e/v7x); MXU accum stays f32.
    # TODO(synk): on v5e (no bf16 VPU/EUP) an f32 GELU would be equally fast.
    g = _gelu_tanh(h.astype(x_ref.dtype) + bfc_ref[...])
    acc = jnp.dot(g.astype(wproj_ref.dtype), wproj_ref[...],
                  preferred_element_type=jnp.float32)
    o_ref[...] = (acc + bproj_ref[...]).astype(o_ref.dtype)


def _mlp_streamed_kernel(x_ref, wfc_ref, bfc_ref, wproj_ref, bproj_ref, o_ref,
                         acc_ref):
    """Hidden axis tiled (grid axis 1, 'arbitrary'): accumulate partial c_proj
    outputs over hidden chunks into an f32 VMEM scratch."""
    j = pl.program_id(1)

    @pl.when(j == 0)
    def _init():
        acc_ref[...] = jnp.zeros_like(acc_ref)

    h = jnp.dot(x_ref[...], wfc_ref[...], preferred_element_type=jnp.float32)
    g = _gelu_tanh(h.astype(x_ref.dtype) + bfc_ref[...])
    acc_ref[...] += jnp.dot(g.astype(wproj_ref.dtype), wproj_ref[...],
                            preferred_element_type=jnp.float32)

    @pl.when(j == pl.num_programs(1) - 1)
    def _finalize():
        o_ref[...] = (acc_ref[...] + bproj_ref[...]).astype(o_ref.dtype)


# ----------------------------- planning -----------------------------

def _round_up(x, m):
    return (x + m - 1) // m * m


def _cdiv(a, b):
    return -(-a // b)


def _vmem_capacity_bytes():
    try:
        info = pltpu.get_tpu_info()
        cap = getattr(info, "vmem_capacity_bytes", None)
        if cap:
            return int(cap)
    except Exception:
        pass
    return 64 * 1024 * 1024  # conservative default (v7x per-core VMEM)


def _plan_tiles(M, C, H, tm_req, in_itemsize, out_itemsize, budget,
                force_streamed, max_hidden_tile):
    """Returns (tm, Mp, num_token_tiles, th, weights_resident)."""
    # Token tile: multiple of 8 sublanes, capped at tm_req; split small M so
    # there are at least two token tiles (keeps both v7x TensorCores busy).
    tm = min(tm_req, _round_up(M, 8))
    if M > 8 and _cdiv(M, tm) < 2:
        tm = _round_up(_cdiv(M, 2), 8)
    Mp = _round_up(M, tm)
    num_i = Mp // tm

    headroom = 4 * 1024 * 1024
    # Double-buffered activation tiles (x in, out) + biases.
    act_bytes = 2 * tm * C * in_itemsize + 2 * tm * C * out_itemsize
    bias_bytes = 2 * (H + C) * 4

    # Resident path: both weights live in VMEM for the whole call (counted
    # double-buffered to be safe w.r.t. the pipeliner's allocation).
    w_bytes = 2 * C * H * in_itemsize
    if (not force_streamed
            and 2 * w_bytes + act_bytes + bias_bytes + headroom <= budget):
        return tm, Mp, num_i, H, True

    # Streamed path: largest lane-aligned divisor of H whose double-buffered
    # weight chunks (+ acc + activation tiles) fit the budget.
    acc_bytes = tm * C * 4
    divisors = [d for d in range(H, 0, -1) if H % d == 0]
    cands = [d for d in divisors if d % 128 == 0] or [H]
    if max_hidden_tile is not None:
        cands = [d for d in cands if d <= max_hidden_tile] or [cands[-1]]
    th = cands[-1]
    for d in cands:
        chunk_bytes = 2 * 2 * C * d * in_itemsize  # wfc + wproj chunks, x2 bufs
        if chunk_bytes + act_bytes + bias_bytes + acc_bytes + headroom <= budget:
            th = d
            break
    return tm, Mp, num_i, th, False


# ----------------------------- wrapper -----------------------------

def mlp_pallas(x, w_fc, b_fc, w_proj, b_proj, *, tm=512,
               compute_dtype=jnp.bfloat16, out_dtype=None,
               force_streamed=False, max_hidden_tile=None):
    """GPT-2 MLP forward: gelu_tanh(x @ w_fc + b_fc) @ w_proj + b_proj.

    x: (B, T, C). w_fc: (C, H), b_fc: (H,) or (1, H), w_proj: (H, C),
    b_proj: (C,) or (1, C). Pre-cast the weights to `compute_dtype` once,
    outside the per-step path (the casts below are then no-ops).
    Returns (B, T, C) in `out_dtype` (default: x.dtype).
    """
    B, T, C = x.shape
    H = w_fc.shape[1]
    assert w_fc.shape == (C, H) and w_proj.shape == (H, C)
    M = B * T
    out_dtype = x.dtype if out_dtype is None else out_dtype

    in_itemsize = jnp.dtype(compute_dtype).itemsize
    out_itemsize = jnp.dtype(out_dtype).itemsize

    vmem_cap = _vmem_capacity_bytes()
    budget = max(vmem_cap - 16 * 1024 * 1024, 16 * 1024 * 1024)

    tm_eff, Mp, num_i, th, resident = _plan_tiles(
        M, C, H, tm, in_itemsize, out_itemsize, budget,
        force_streamed, max_hidden_tile)

    # No-ops when the caller already stores params in compute_dtype.
    x2 = x.reshape(M, C).astype(compute_dtype)
    if Mp != M:
        x2 = jnp.pad(x2, ((0, Mp - M), (0, 0)))
    wfc = w_fc.astype(compute_dtype)
    wproj = w_proj.astype(compute_dtype)
    bfc = b_fc.reshape(1, H).astype(compute_dtype)    # added pre-GELU
    bproj = b_proj.reshape(1, C).astype(jnp.float32)  # added to f32 accumulator

    w_reads = 1 if resident else num_i
    bytes_accessed = (
        Mp * C * in_itemsize                     # x
        + w_reads * 2 * C * H * in_itemsize      # weights (re-read per tile if streamed)
        + w_reads * H * in_itemsize + C * 4      # biases
        + Mp * C * out_itemsize)                 # output
    cost = pl.CostEstimate(
        flops=2 * 2 * Mp * C * H,                # two matmuls
        transcendentals=Mp * H,                  # tanh in GELU
        bytes_accessed=bytes_accessed,
    )

    if resident:
        grid_spec = pltpu.PrefetchScalarGridSpec(
            num_scalar_prefetch=0,
            grid=(num_i,),
            in_specs=[
                pl.BlockSpec((tm_eff, C), lambda i: (i, 0)),  # x token tile
                pl.BlockSpec((C, H), lambda i: (0, 0)),       # c_fc W (resident)
                pl.BlockSpec((1, H), lambda i: (0, 0)),       # c_fc bias
                pl.BlockSpec((H, C), lambda i: (0, 0)),       # c_proj W (resident)
                pl.BlockSpec((1, C), lambda i: (0, 0)),       # c_proj bias
            ],
            out_specs=pl.BlockSpec((tm_eff, C), lambda i: (i, 0)),
        )
        kernel = _mlp_resident_kernel
        dims = ("parallel",)
    else:
        grid_spec = pltpu.PrefetchScalarGridSpec(
            num_scalar_prefetch=0,
            grid=(num_i, H // th),
            in_specs=[
                pl.BlockSpec((tm_eff, C), lambda i, j: (i, 0)),  # x (reused over j)
                pl.BlockSpec((C, th), lambda i, j: (0, j)),      # c_fc W chunk
                pl.BlockSpec((1, th), lambda i, j: (0, j)),      # c_fc bias chunk
                pl.BlockSpec((th, C), lambda i, j: (j, 0)),      # c_proj W chunk
                pl.BlockSpec((1, C), lambda i, j: (0, 0)),       # c_proj bias
            ],
            out_specs=pl.BlockSpec((tm_eff, C), lambda i, j: (i, 0)),
            scratch_shapes=[pltpu.VMEM((tm_eff, C), jnp.float32)],
        )
        kernel = _mlp_streamed_kernel
        dims = ("parallel", "arbitrary")

    out2 = pl.pallas_call(
        kernel,
        out_shape=jax.ShapeDtypeStruct((Mp, C), out_dtype),
        grid_spec=grid_spec,
        compiler_params=pltpu.CompilerParams(
            dimension_semantics=dims,
            vmem_limit_bytes=int(budget),
        ),
        cost_estimate=cost,
    )(x2, wfc, bfc, wproj, bproj)

    if Mp != M:
        out2 = out2[:M]
    return out2.reshape(B, T, C)


def mlp_reference(x, w_fc, b_fc, w_proj, b_proj):
    h = jnp.einsum("btc,ch->bth", x, w_fc) + b_fc.reshape(-1)
    g = 0.5 * h * (1.0 + jnp.tanh(_SQRT_2_OVER_PI * (h + _GELU_C * h ** 3)))
    return jnp.einsum("bth,hc->btc", g, w_proj) + b_proj.reshape(-1)


if __name__ == "__main__":
    key = jax.random.PRNGKey(0)

    def make_case(k, B, T, C, H):
        kx, k1, k2, k3, k4 = jax.random.split(k, 5)
        x = jax.random.normal(kx, (B, T, C), dtype=jnp.float32)
        w_fc = jax.random.normal(k1, (C, H), dtype=jnp.float32) / jnp.sqrt(C)
        b_fc = jax.random.normal(k2, (1, H), dtype=jnp.float32) * 0.01
        w_proj = jax.random.normal(k3, (H, C), dtype=jnp.float32) / jnp.sqrt(H)
        b_proj = jax.random.normal(k4, (1, C), dtype=jnp.float32) * 0.01
        return x, w_fc, b_fc, w_proj, b_proj

    kc1, kc2 = jax.random.split(key)

    # Case 1: small GPT-ish config (n_embd=32, hidden=4*32=128) -> exercises
    # the weights-resident 1-D-grid path. Weights are pre-cast to bf16 ONCE
    # here, outside the per-call path (hoisted cast).
    x, w_fc, b_fc, w_proj, b_proj = make_case(kc1, 2, 8, 32, 128)
    wfc_bf = w_fc.astype(jnp.bfloat16)
    wproj_bf = w_proj.astype(jnp.bfloat16)
    out = jax.block_until_ready(mlp_pallas(x, wfc_bf, b_fc, wproj_bf, b_proj))
    ref = mlp_reference(x, w_fc, b_fc, w_proj, b_proj)
    assert out.shape == x.shape and out.dtype == x.dtype
    err1 = float(jnp.max(jnp.abs(out - ref)))
    # bf16 weights/activations + bf16 GELU with f32 MXU accumulation.
    assert jnp.allclose(out, ref, atol=6e-2, rtol=6e-2), (
        f"resident path mismatch vs reference, max_abs_err={err1}")

    # Case 2: force the streamed (hidden-chunked, 2-D grid, accumulator) path
    # so its init/accumulate/finalize code is exercised and compiled too.
    x2, w_fc2, b_fc2, w_proj2, b_proj2 = make_case(kc2, 2, 16, 64, 256)
    out2 = jax.block_until_ready(
        mlp_pallas(x2, w_fc2.astype(jnp.bfloat16), b_fc2,
                   w_proj2.astype(jnp.bfloat16), b_proj2,
                   force_streamed=True, max_hidden_tile=128))
    ref2 = mlp_reference(x2, w_fc2, b_fc2, w_proj2, b_proj2)
    err2 = float(jnp.max(jnp.abs(out2 - ref2)))
    assert jnp.allclose(out2, ref2, atol=6e-2, rtol=6e-2), (
        f"streamed path mismatch vs reference, max_abs_err={err2}")

    print("KERNEL_OK")
</pallas_src>

<mosaic_0001>
module attributes {stable_mosaic.version = 11 : i64} {
  func.func @_mlp_resident_kernel(%arg0: i32, %arg1: memref<8x32xbf16, #tpu.memory_space<vmem>>, %arg2: memref<32x128xbf16, #tpu.memory_space<vmem>>, %arg3: memref<1x128xbf16, #tpu.memory_space<vmem>>, %arg4: memref<128x32xbf16, #tpu.memory_space<vmem>>, %arg5: memref<1x32xf32, #tpu.memory_space<vmem>>, %arg6: memref<8x32xf32, #tpu.memory_space<vmem>>) attributes {dimension_semantics = [#tpu.dimension_semantics<parallel>], iteration_bounds = array<i64: 2>, scalar_prefetch = 0 : i64, scratch_operands = 0 : i64, tpu.core_type = #tpu.core_type<tc>, window_params = [{transform_indices = @transform_0, window_bounds = array<i64: 8, 32>}, {pipeline_mode = #tpu.pipeline_mode<synchronous>, transform_indices = @transform_1, window_bounds = array<i64: 32, 128>}, {pipeline_mode = #tpu.pipeline_mode<synchronous>, transform_indices = @transform_2, window_bounds = array<i64: 1, 128>}, {pipeline_mode = #tpu.pipeline_mode<synchronous>, transform_indices = @transform_3, window_bounds = array<i64: 128, 32>}, {pipeline_mode = #tpu.pipeline_mode<synchronous>, transform_indices = @transform_4, window_bounds = array<i64: 1, 32>}, {transform_indices = @transform_5, window_bounds = array<i64: 8, 32>}]} {
    %c0 = arith.constant 0 : index
    %c0_0 = arith.constant 0 : index
    %0 = vector.load %arg1[%c0, %c0_0] : memref<8x32xbf16, #tpu.memory_space<vmem>>, vector<8x32xbf16>
    %c0_1 = arith.constant 0 : index
    %c0_2 = arith.constant 0 : index
    %1 = vector.load %arg2[%c0_1, %c0_2] : memref<32x128xbf16, #tpu.memory_space<vmem>>, vector<32x128xbf16>
    %cst = arith.constant dense<0.000000e+00> : vector<8x128xf32>
    %2 = tpu.matmul %0, %1, %cst {dimension_numbers = #tpu.dot_dimension_numbers<[1], [0], [0], [1], [0, 0, 1, 1], [], []>} : vector<8x32xbf16>, vector<32x128xbf16>, vector<8x128xf32> -> vector<8x128xf32>
    %3 = arith.truncf %2 : vector<8x128xf32> to vector<8x128xbf16>
    %c0_3 = arith.constant 0 : index
    %c0_4 = arith.constant 0 : index
    %4 = vector.load %arg3[%c0_3, %c0_4] : memref<1x128xbf16, #tpu.memory_space<vmem>>, vector<1x128xbf16>
    %5 = vector.broadcast %4 : vector<1x128xbf16> to vector<8x128xbf16>
    %6 = arith.addf %3, %5 : vector<8x128xbf16>
    %7 = arith.mulf %6, %6 : vector<8x128xbf16>
    %cst_5 = arith.constant 7.968750e-01 : bf16
    %8 = vector.broadcast %cst_5 : bf16 to vector<8x128xbf16>
    %9 = arith.mulf %8, %6 : vector<8x128xbf16>
    %cst_6 = arith.constant 4.467770e-02 : bf16
    %10 = vector.broadcast %cst_6 : bf16 to vector<8x128xbf16>
    %11 = arith.mulf %10, %7 : vector<8x128xbf16>
    %cst_7 = arith.constant 1.000000e+00 : bf16
    %12 = vector.broadcast %cst_7 : bf16 to vector<8x128xbf16>
    %13 = arith.addf %12, %11 : vector<8x128xbf16>
    %14 = arith.mulf %9, %13 : vector<8x128xbf16>
    %15 = math.tanh %14 : vector<8x128xbf16>
    %cst_8 = arith.constant 5.000000e-01 : bf16
    %16 = vector.broadcast %cst_8 : bf16 to vector<8x128xbf16>
    %17 = arith.mulf %16, %15 : vector<8x128xbf16>
    %cst_9 = arith.constant 5.000000e-01 : bf16
    %18 = vector.broadcast %cst_9 : bf16 to vector<8x128xbf16>
    %19 = arith.addf %18, %17 : vector<8x128xbf16>
    %20 = arith.mulf %6, %19 : vector<8x128xbf16>
    %c0_10 = arith.constant 0 : index
    %c0_11 = arith.constant 0 : index
    %21 = vector.load %arg4[%c0_10, %c0_11] : memref<128x32xbf16, #tpu.memory_space<vmem>>, vector<128x32xbf16>
    %cst_12 = arith.constant dense<0.000000e+00> : vector<8x32xf32>
    %22 = tpu.matmul %20, %21, %cst_12 {dimension_numbers = #tpu.dot_dimension_numbers<[1], [0], [0], [1], [0, 0, 1, 1], [], []>} : vector<8x128xbf16>, vector<128x32xbf16>, vector<8x32xf32> -> vector<8x32xf32>
    %c0_13 = arith.constant 0 : index
    %c0_14 = arith.constant 0 : index
    %23 = vector.load %arg5[%c0_13, %c0_14] : memref<1x32xf32, #tpu.memory_space<vmem>>, vector<1x32xf32>
    %24 = vector.broadcast %23 : vector<1x32xf32> to vector<8x32xf32>
    %25 = arith.addf %22, %24 : vector<8x32xf32>
    %c0_15 = arith.constant 0 : index
    %c0_16 = arith.constant 0 : index
    %26 = vector.load %arg6[%c0_15, %c0_16] : memref<8x32xf32, #tpu.memory_space<vmem>>, vector<8x32xf32>
    tpu.vector_store %arg6[%c0_15, %c0_16], %25 {strides = array<i32>} : memref<8x32xf32, #tpu.memory_space<vmem>>, vector<8x32xf32>,
    return
  }
  func.func @transform_0(%arg0: i32) -> (i32, i32) {
    %c0_i32 = arith.constant 0 : i32
    %c0_i32_0 = arith.constant 0 : i32
    return %arg0, %c0_i32 : i32, i32
  }
  func.func @transform_1(%arg0: i32) -> (i32, i32) {
    %c0_i32 = arith.constant 0 : i32
    %c0_i32_0 = arith.constant 0 : i32
    %c0_i32_1 = arith.constant 0 : i32
    return %c0_i32, %c0_i32_0 : i32, i32
  }
  func.func @transform_2(%arg0: i32) -> (i32, i32) {
    %c0_i32 = arith.constant 0 : i32
    %c0_i32_0 = arith.constant 0 : i32
    %c0_i32_1 = arith.constant 0 : i32
    return %c0_i32, %c0_i32_0 : i32, i32
  }
  func.func @transform_3(%arg0: i32) -> (i32, i32) {
    %c0_i32 = arith.constant 0 : i32
    %c0_i32_0 = arith.constant 0 : i32
    %c0_i32_1 = arith.constant 0 : i32
    return %c0_i32, %c0_i32_0 : i32, i32
  }
  func.func @transform_4(%arg0: i32) -> (i32, i32) {
    %c0_i32 = arith.constant 0 : i32
    %c0_i32_0 = arith.constant 0 : i32
    %c0_i32_1 = arith.constant 0 : i32
    return %c0_i32, %c0_i32_0 : i32, i32
  }
  func.func @transform_5(%arg0: i32) -> (i32, i32) {
    %c0_i32 = arith.constant 0 : i32
    %c0_i32_0 = arith.constant 0 : i32
    return %arg0, %c0_i32 : i32, i32
  }
}

</mosaic_0001>

<llo_original>
// kernel: tpu_custom_call.1
$region0: #{tpu_custom_call.1}
  #allocation0 [shape = 'u32[]', space=smem, size = 0x4, offset = 0x4, fixed_abs, tag = 'smem constant byte address 0x4 - core index']
  #allocation1 [shape = 'u32[144,128]{1,0:T(1,128)}', space=vmem, size = 0x12000, scoped, tag = 'internal scratch']
  %s0 = inlined_call_operand.vmem [shape: bf16[16,32], index: 0, kind: input, shape index: {}]
  %s1 = inlined_call_operand.vmem [shape: bf16[32,128], index: 1, kind: input, shape index: {}]
  %s2 = inlined_call_operand.vmem [shape: bf16[1,128], index: 2, kind: input, shape index: {}]
  %s3 = inlined_call_operand.vmem [shape: bf16[128,32], index: 3, kind: input, shape index: {}]
  %s4 = inlined_call_operand.vmem [shape: f32[1,32], index: 4, kind: input, shape index: {}]
  %s5 = inlined_call_operand.hbm [shape: f32[16,32], index: 5, kind: output, shape index: {}]
  %s6 = sld [smem:[#allocation0]]
  $region53: #{tpu_custom_call.1} parent=0
    _
  %s8 = ssub.s32 1, %s6
  %s9 = scalar_select 0, %s8, %s6
  $region1: #{tpu_custom_call.1} parent=0
    #allocation2 [shape = 'u8[8192]{0}', space=vmem, size = 0x2000, scoped, tag = 'output window, operand 0']
    #allocation3 [shape = 's32[2]{0}', space=sflag, size = 0x8, scoped, tag = 'scoped memory for tpu_custom_call.1']
    %10 = vsyncpa [#allocation3], 0
    %s11 = scalar_lea.sflag [#allocation3], 1
    %12 = vsyncpa %s11, 0
    loop: start=0, step=1, limit=4
    $region2: #{tpu_custom_call.1} parent=1 // loop_pre_header
      _
    $region3: #{tpu_custom_call.1} parent=1 // loop_header
      %s14 = sphi 0, %s18
      %p15 = scmp.ge.s32.totalorder %s14, 4
      %s24 = sphi 0, %s26
      %s27 = sphi 0, %s24
      %s28 = sphi 0, %s27
      %s44 = sphi 0, %s28
      %s48 = sphi 0, %s48
      %s50 = sphi 0, %s48
      %s51 = sphi 0, %s50
      %s65 = sphi 0, %s51
      %s69 = sphi 0, %s69
      %s71 = sphi 0, %s69
      %s72 = sphi 0, %s71
      %s86 = sphi 0, %s72
      %s90 = sphi 0, %s90
      %s92 = sphi 0, %s90
      %s93 = sphi 0, %s92
      %s107 = sphi 0, %s93
      %s111 = sphi 0, %s111
      %s113 = sphi 0, %s111
      %s114 = sphi 0, %s113
      %s128 = sphi 0, %s114
      %s134 = sphi 0, %s136
      %s137 = sphi 0, %s134
      %s138 = sphi 0, %s137
      %s154 = sphi 0, %s138
    $region4: #{tpu_custom_call.1} parent=1 // loop_header_branch
      %17 = sbr.rel (%p15) target = $region8
    $region5: #{tpu_custom_call.1} parent=1 // loop_body
      %s19 = ssub.s32 %s14, 1
      %s20 = ssub.s32 %s14, 2
      %s21 = sadd.s32 %s14, 1
      %s22 = ssub.s32 %s14, %s21
      %p23 = scmp.eq.s32.totalorder %s22, 0
      %s25 = sadd.s32 %s24, 1
      %s26 = scalar_select %p23, %s24, %s25
      %p29 = pneg %p23
      %p30 = scmp.eq.s32.totalorder %s14, 1
      %p31 = por %p29, %p30
      %p32 = scmp.ne.s32.totalorder %s24, %s27
      %p33 = scmp.eq.s32.totalorder %s14, 0
      %p34 = por %p32, %p33
      %p35 = scmp.ne.s32.totalorder %s24, %s27
      %p36 = scmp.eq.s32.totalorder %s19, 1
      %p37 = por %p35, %p36
      %p38 = scmp.ne.s32.totalorder %s27, %s28
      %p39 = scmp.eq.s32.totalorder %s19, 0
      %p40 = por %p38, %p39
      %p41 = scmp.ne.s32.totalorder %s27, %s28
      %p42 = scmp.eq.s32.totalorder %s20, 1
      %p43 = por %p41, %p42
      %p45 = scmp.ne.s32.totalorder %s28, %s44
      %p46 = scmp.eq.s32.totalorder %s20, 0
      %p47 = por %p45, %p46
      %s49 = sadd.s32 %s48, 1
      %p52 = scmp.eq.s32.totalorder %s14, 1
      %p53 = scmp.ne.s32.totalorder %s48, %s50
      %p54 = scmp.eq.s32.totalorder %s14, 0
      %p55 = por %p53, %p54
      %p56 = scmp.ne.s32.totalorder %s48, %s50
      %p57 = scmp.eq.s32.totalorder %s19, 1
      %p58 = por %p56, %p57
      %p59 = scmp.ne.s32.totalorder %s50, %s51
      %p60 = scmp.eq.s32.totalorder %s19, 0
      %p61 = por %p59, %p60
      %p62 = scmp.ne.s32.totalorder %s50, %s51
      %p63 = scmp.eq.s32.totalorder %s20, 1
      %p64 = por %p62, %p63
      %p66 = scmp.ne.s32.totalorder %s51, %s65
      %p67 = scmp.eq.s32.totalorder %s20, 0
      %p68 = por %p66, %p67
      %s70 = sadd.s32 %s69, 1
      %p73 = scmp.eq.s32.totalorder %s14, 1
      %p74 = scmp.ne.s32.totalorder %s69, %s71
      %p75 = scmp.eq.s32.totalorder %s14, 0
      %p76 = por %p74, %p75
      %p77 = scmp.ne.s32.totalorder %s69, %s71
      %p78 = scmp.eq.s32.totalorder %s19, 1
      %p79 = por %p77, %p78
      %p80 = scmp.ne.s32.totalorder %s71, %s72
      %p81 = scmp.eq.s32.totalorder %s19, 0
      %p82 = por %p80, %p81
      %p83 = scmp.ne.s32.totalorder %s71, %s72
      %p84 = scmp.eq.s32.totalorder %s20, 1
      %p85 = por %p83, %p84
      %p87 = scmp.ne.s32.totalorder %s72, %s86
      %p88 = scmp.eq.s32.totalorder %s20, 0
      %p89 = por %p87, %p88
      %s91 = sadd.s32 %s90, 1
      %p94 = scmp.eq.s32.totalorder %s14, 1
      %p95 = scmp.ne.s32.totalorder %s90, %s92
      %p96 = scmp.eq.s32.totalorder %s14, 0
      %p97 = por %p95, %p96
      %p98 = scmp.ne.s32.totalorder %s90, %s92
      %p99 = scmp.eq.s32.totalorder %s19, 1
      %p100 = por %p98, %p99
      %p101 = scmp.ne.s32.totalorder %s92, %s93
      %p102 = scmp.eq.s32.totalorder %s19, 0
      %p103 = por %p101, %p102
      %p104 = scmp.ne.s32.totalorder %s92, %s93
      %p105 = scmp.eq.s32.totalorder %s20, 1
      %p106 = por %p104, %p105
      %p108 = scmp.ne.s32.totalorder %s93, %s107
      %p109 = scmp.eq.s32.totalorder %s20, 0
      %p110 = por %p108, %p109
      %s112 = sadd.s32 %s111, 1
      %p115 = scmp.eq.s32.totalorder %s14, 1
      %p116 = scmp.ne.s32.totalorder %s111, %s113
      %p117 = scmp.eq.s32.totalorder %s14, 0
      %p118 = por %p116, %p117
      %p119 = scmp.ne.s32.totalorder %s111, %s113
      %p120 = scmp.eq.s32.totalorder %s19, 1
      %p121 = por %p119, %p120
      %p122 = scmp.ne.s32.totalorder %s113, %s114
      %p123 = scmp.eq.s32.totalorder %s19, 0
      %p124 = por %p122, %p123
      %p125 = scmp.ne.s32.totalorder %s113, %s114
      %p126 = scmp.eq.s32.totalorder %s20, 1
      %p127 = por %p125, %p126
      %p129 = scmp.ne.s32.totalorder %s114, %s128
      %p130 = scmp.eq.s32.totalorder %s20, 0
      %p131 = por %p129, %p130
      %s132 = ssub.s32 %s14, %s21
      %p133 = scmp.eq.s32.totalorder %s132, 0
      %s135 = sadd.s32 %s134, 1
      %s136 = scalar_select %p133, %s134, %s135
      %p139 = pneg %p133
      %p140 = scmp.eq.s32.totalorder %s14, 1
      %p141 = por %p139, %p140
      %p142 = scmp.ne.s32.totalorder %s134, %s137
      %p143 = scmp.eq.s32.totalorder %s14, 0
      %p144 = por %p142, %p143
      %p145 = scmp.ne.s32.totalorder %s134, %s137
      %p146 = scmp.eq.s32.totalorder %s19, 1
      %p147 = por %p145, %p146
      %p148 = scmp.ne.s32.totalorder %s137, %s138
      %p149 = scmp.eq.s32.totalorder %s19, 0
      %p150 = por %p148, %p149
      %p151 = scmp.ne.s32.totalorder %s137, %s138
      %p152 = scmp.eq.s32.totalorder %s20, 1
      %p153 = por %p151, %p152
      %p155 = scmp.ne.s32.totalorder %s138, %s154
      %p156 = scmp.eq.s32.totalorder %s20, 0
      %p157 = por %p155, %p156
      %p158 = scmp.le.s32.totalorder 1, %s14
      %p159 = scmp.lt.s32.totalorder %s14, 3
      %p160 = pnand %p158, %p159
      %p161 = pneg %p160
      // Predicated region
      $region9: #{tpu_custom_call.1} parent=5 // pred_check
        _
      $region10: #{tpu_custom_call.1} parent=5 // pred_check_branch
        %163 = sbr.rel (%p160) target = $region12
      $region11: #{tpu_custom_call.1} parent=5 // pred_region
        %s164 = ssub.s32 %s14, 1
        // Predicated region
        $region13: #{tpu_custom_call.1} parent=11 // pred_check
          %p165 = pneg %p61
        $region14: #{tpu_custom_call.1} parent=11 // pred_check_branch
          %167 = sbr.rel (%p165) target = $region16
        $region15: #{tpu_custom_call.1} parent=11 // pred_region
          _
        $region16: #{tpu_custom_call.1} parent=11 // pred_fallthru
          _
        // Predicated region
        $region17: #{tpu_custom_call.1} parent=11 // pred_check
          %p168 = pneg %p82
        $region18: #{tpu_custom_call.1} parent=11 // pred_check_branch
          %170 = sbr.rel (%p168) target = $region20
        $region19: #{tpu_custom_call.1} parent=11 // pred_region
          _
        $region20: #{tpu_custom_call.1} parent=11 // pred_fallthru
          _
        // Predicated region
        $region21: #{tpu_custom_call.1} parent=11 // pred_check
          %p171 = pneg %p103
        $region22: #{tpu_custom_call.1} parent=11 // pred_check_branch
          %173 = sbr.rel (%p171) target = $region24
        $region23: #{tpu_custom_call.1} parent=11 // pred_region
          _
        $region24: #{tpu_custom_call.1} parent=11 // pred_fallthru
          _
        // Predicated region
        $region25: #{tpu_custom_call.1} parent=11 // pred_check
          %p174 = pneg %p124
        $region26: #{tpu_custom_call.1} parent=11 // pred_check_branch
          %176 = sbr.rel (%p174) target = $region28
        $region27: #{tpu_custom_call.1} parent=11 // pred_region
          _
        $region28: #{tpu_custom_call.1} parent=11 // pred_fallthru
          _
      $region12: #{tpu_custom_call.1} parent=5 // pred_fallthru
        _
      %p177 = scmp.lt.s32.totalorder %s14, 2
      // Predicated region
      $region29: #{tpu_custom_call.1} parent=5 // pred_check
        %p178 = pneg %p177
      $region30: #{tpu_custom_call.1} parent=5 // pred_check_branch
        %180 = sbr.rel (%p178) target = $region32
      $region31: #{tpu_custom_call.1} parent=5 // pred_region
        // Predicated region
        $region33: #{tpu_custom_call.1} parent=31 // pred_check
          %p181 = pneg %p34
        $region34: #{tpu_custom_call.1} parent=31 // pred_check_branch
          %183 = sbr.rel (%p181) target = $region36
        $region35: #{tpu_custom_call.1} parent=31 // pred_region
          %p184 = scmp.lt.s32.totalorder %s14, 1
          %s185 = scalar_select %p184, %s14, 1
          %s186 = smul.addr %s185, 4
          %s187 = scalar_lea.vmem %s0, %s186
        $region36: #{tpu_custom_call.1} parent=31 // pred_fallthru
          _
      $region32: #{tpu_custom_call.1} parent=5 // pred_fallthru
        _
      %p188 = scmp.le.s32.totalorder 1, %s14
      %p189 = scmp.lt.s32.totalorder %s14, 3
      %p190 = pnand %p188, %p189
      %p191 = pneg %p190
      // Predicated region
      $region37: #{tpu_custom_call.1} parent=5 // pred_check
        _
      $region38: #{tpu_custom_call.1} parent=5 // pred_check_branch
        %193 = sbr.rel (%p190) target = $region40
      $region39: #{tpu_custom_call.1} parent=5 // pred_region
        %s194 = ssub.s32 %s14, 1
        %p195 = scmp.lt.s32.totalorder %s19, 1
        %s196 = scalar_select %p195, %s19, 1
        %s197 = smul.addr %s196, 4
        %s198 = scalar_lea.vmem %s0, %s197
        %p199 = pneg %p40
        %p200 = pneg %p37
        %p201 = pneg %p61
        %p202 = pneg %p58
        %p203 = pneg %p82
        %p204 = pneg %p79
        %p205 = pneg %p103
        %p206 = pneg %p100
        %p207 = pneg %p124
        %p208 = pneg %p121
        %p209 = pneg %p150
        %p210 = pneg %p147
        %s211 = sand.u32 %s137, 1
        %s212 = scalar_lea.sflag [#allocation3], %s211
        %s213 = sand.u32 %s137, 1
        %s214 = smul.addr %s213, 8
        %s215 = scalar_lea.vmem [#allocation2], %s214
        %p216 = scmp.lt.s32.totalorder %s19, 1
        %s217 = scalar_select %p216, %s19, 1
        %s218 = smul.addr %s217, 4
        %s219 = scalar_lea.vmem %s0, %s218
        %v225 = vld [vmem:[%s219] sm:$0xf]
        %v226 = vld [vmem:[%s1] sm:$0xf]
        %v227 = vld [vmem:[%s1 + $0x4] sm:$0xf]
        %v228 = vld [vmem:[%s1 + $0x8] sm:$0xf]
        %v229 = vld [vmem:[%s1 + $0xc] sm:$0xf]
        %v234 = vunpack.c.l.b16 %v226
        %v235 = vunpack.c.l.b16 %v227
        %v236 = vunpack.c.l.b16 %v228
        %v237 = vunpack.c.l.b16 %v229
        %v238 = vpack.c.b16 %v235, %v234
        %v239 = vpack.c.b16 %v237, %v236
        %vm242 = vcmask 261120
        %v244 = vsel %vm242, %v225, 0
        %246 = vmatprep.subr.bf16.mxu0 0
        %247 = vmatpush1.bf16.msra.mxu0 0
        %248 = vmatprep.subr.bf16.mxu0 0
        %249 = vmatpush1.bf16.msra.mxu0 0
        %250 = vmatprep.subr.bf16.mxu0 0
        %251 = vmatpush1.bf16.msra.mxu0 0
        %252 = vmatprep.subr.bf16.mxu0 0
        %253 = vmatpush1.bf16.msra.mxu0 0
        %254 = vmatprep.subr.bf16.mxu0 0
        %255 = vmatpush1.bf16.msra.mxu0 0
        %256 = vmatprep.subr.bf16.mxu0 0
        %257 = vmatpush1.bf16.msra.mxu0 0
        %258 = vmatprep.subr.bf16.mxu0 0
        %259 = vmatpush1.bf16.msra.mxu0 %v239
        %260 = vmatprep.subr.bf16.mxu0 0
        %261 = vmatpush1.bf16.msra.mxu0 %v238
        %262 = vmatprep.subr.bf16.mxu0 0
        %263 = vmatpush2.bf16.msra.mxu0 0
        %264 = vmatprep.subr.bf16.mxu0 0
        %265 = vmatpush2.bf16.msra.mxu0 0
        %266 = vmatprep.subr.bf16.mxu0 0
        %267 = vmatpush2.bf16.msra.mxu0 0
        %268 = vmatprep.subr.bf16.mxu0 0
        %269 = vmatpush2.bf16.msra.mxu0 0
        %270 = vmatprep.subr.bf16.mxu0 0
        %271 = vmatpush2.bf16.msra.mxu0 0
        %272 = vmatprep.subr.bf16.mxu0 0
        %273 = vmatpush2.bf16.msra.mxu0 0
        %274 = vmatprep.subr.bf16.mxu0 0
        %275 = vmatpush2.bf16.msra.mxu0 0
        %276 = vmatprep.subr.bf16.mxu0 0
        %277 = vmatpush2.bf16.msra.mxu0 0
        %278 = vmatprep.mubr.bf16.mxu0 0
        %279 = vmatmul.mubr.bf16.gmra.mxu0 %v244
        %v280 = vpop.f32.mrf.mxu0
        %v281 = vadd.f32 0.0, %v280
        %v282 = vpop.f32.mrf.mxu0
        %v283 = vpop.f32.mrf.mxu0
        %v284 = vpop.f32.mrf.mxu0
        %285 = vdwg.mxu0
        %v286 = vpack.c.bf16 %v281, %v281
        %v287 = vld [vmem:[%s2] sm:$0x1]
        %v289 = vpack.i.b16 %v287, %v287
        %v291 = vlaneseq
        %v292 = vshrl.u32 %v291, 7
        %v293 = vsub.s32 0, %v292
        %v294 = vrot.slane %v289, %v293
        %v295 = vadd.bf16 %v286, %v294
        %v296 = vmul.bf16 %v295, %v295
        %v297 = vmul.bf16 %v295, 1061961548
        %v298 = vmul.bf16 %v296, 1027030327
        %v299 = vadd.bf16 %v298, 1065369472
        %v300 = vmul.bf16 %v297, %v299
        %v301 = vtanh.bf16.pop %v300
        %v302 = vmul.bf16 %v301, 1056980736
        %v303 = vadd.bf16 %v302, 1056980736
        %v304 = vmul.bf16 %v295, %v303
        %v305 = vld [vmem:[%s3] sm:$0xf]
        %v306 = vld [vmem:[%s3 + $0x4] sm:$0xf]
        %v307 = vld [vmem:[%s3 + $0x8] sm:$0xf]
        %v308 = vld [vmem:[%s3 + $0xc] sm:$0xf]
        %v309 = vld [vmem:[%s3 + $0x10] sm:$0xf]
        %v310 = vld [vmem:[%s3 + $0x14] sm:$0xf]
        %v311 = vld [vmem:[%s3 + $0x18] sm:$0xf]
        %v312 = vld [vmem:[%s3 + $0x1c] sm:$0xf]
        %v313 = vld [vmem:[%s3 + $0x20] sm:$0xf]
        %v314 = vld [vmem:[%s3 + $0x24] sm:$0xf]
        %v315 = vld [vmem:[%s3 + $0x28] sm:$0xf]
        %v316 = vld [vmem:[%s3 + $0x2c] sm:$0xf]
        %v317 = vld [vmem:[%s3 + $0x30] sm:$0xf]
        %v318 = vld [vmem:[%s3 + $0x34] sm:$0xf]
        %v319 = vld [vmem:[%s3 + $0x38] sm:$0xf]
        %v320 = vld [vmem:[%s3 + $0x3c] sm:$0xf]
        %v321 = vld [vmem:[%s4] sm:$0x1]
        %v323 = vlaneseq
        %v324 = vshrl.u32 %v323, 7
        %v325 = vsub.s32 0, %v324
        %v326 = vrot.slane %v321, %v325
        %v344 = vunpack.c.l.b16 %v305
        %v345 = vunpack.c.l.b16 %v306
        %v346 = vunpack.c.l.b16 %v307
        %v347 = vunpack.c.l.b16 %v308
        %v348 = vunpack.c.l.b16 %v309
        %v349 = vunpack.c.l.b16 %v310
        %v350 = vunpack.c.l.b16 %v311
        %v351 = vunpack.c.l.b16 %v312
        %v352 = vunpack.c.l.b16 %v313
        %v353 = vunpack.c.l.b16 %v314
        %v354 = vunpack.c.l.b16 %v315
        %v355 = vunpack.c.l.b16 %v316
        %v356 = vunpack.c.l.b16 %v317
        %v357 = vunpack.c.l.b16 %v318
        %v358 = vunpack.c.l.b16 %v319
        %v359 = vunpack.c.l.b16 %v320
        %v360 = vpack.c.b16 %v345, %v344
        %v361 = vpack.c.b16 %v347, %v346
        %v362 = vpack.c.b16 %v349, %v348
        %v363 = vpack.c.b16 %v351, %v350
        %v364 = vpack.c.b16 %v353, %v352
        %v365 = vpack.c.b16 %v355, %v354
        %v366 = vpack.c.b16 %v357, %v356
        %v367 = vpack.c.b16 %v359, %v358
        %376 = vmatprep.subr.bf16.mxu0 0
        %377 = vmatpush1.bf16.msra.mxu0 %v367
        %378 = vmatprep.subr.bf16.mxu0 0
        %379 = vmatpush1.bf16.msra.mxu0 %v366
        %380 = vmatprep.subr.bf16.mxu0 0
        %381 = vmatpush1.bf16.msra.mxu0 %v365
        %382 = vmatprep.subr.bf16.mxu0 0
        %383 = vmatpush1.bf16.msra.mxu0 %v364
        %384 = vmatprep.subr.bf16.mxu0 0
        %385 = vmatpush1.bf16.msra.mxu0 %v363
        %386 = vmatprep.subr.bf16.mxu0 0
        %387 = vmatpush1.bf16.msra.mxu0 %v362
        %388 = vmatprep.subr.bf16.mxu0 0
        %389 = vmatpush1.bf16.msra.mxu0 %v361
        %390 = vmatprep.subr.bf16.mxu0 0
        %391 = vmatpush1.bf16.msra.mxu0 %v360
        %392 = vmatprep.subr.bf16.mxu0 0
        %393 = vmatpush2.bf16.msra.mxu0 0
        %394 = vmatprep.subr.bf16.mxu0 0
        %395 = vmatpush2.bf16.msra.mxu0 0
        %396 = vmatprep.subr.bf16.mxu0 0
        %397 = vmatpush2.bf16.msra.mxu0 0
        %398 = vmatprep.subr.bf16.mxu0 0
        %399 = vmatpush2.bf16.msra.mxu0 0
        %400 = vmatprep.subr.bf16.mxu0 0
        %401 = vmatpush2.bf16.msra.mxu0 0
        %402 = vmatprep.subr.bf16.mxu0 0
        %403 = vmatpush2.bf16.msra.mxu0 0
        %404 = vmatprep.subr.bf16.mxu0 0
        %405 = vmatpush2.bf16.msra.mxu0 0
        %406 = vmatprep.subr.bf16.mxu0 0
        %407 = vmatpush2.bf16.msra.mxu0 0
        %408 = vmatprep.mubr.bf16.mxu0 0
        %409 = vmatmul.mubr.bf16.gmra.mxu0 %v304
        %v410 = vpop.f32.mrf.mxu0
        %v411 = vadd.f32 %v326, %v410
        %v412 = vpop.f32.mrf.mxu0
        %v413 = vpop.f32.mrf.mxu0
        %v414 = vpop.f32.mrf.mxu0
        %415 = vdwg.mxu0
        %416 = vst.msk [vmem:[%s215] sm:$0xff] %vm242, %v411
        %s417 = sand.u32 %s137, 1
        %s418 = scalar_lea.sflag [#allocation3], %s417
        %s419 = sand.u32 %s137, 1
        %s420 = smul.addr %s419, 8
        %s421 = scalar_lea.vmem [#allocation2], %s420
        // Predicated region
        $region41: #{tpu_custom_call.1} parent=39 // pred_check
          %p422 = pneg %p147
        $region42: #{tpu_custom_call.1} parent=39 // pred_check_branch
          %424 = sbr.rel (%p422) target = $region44
        $region43: #{tpu_custom_call.1} parent=39 // pred_region
          %s426 = ssub.s32 128, 128
          %427 = vsyncadd %s418, %s426
          %s428 = smul.addr %s19, 128
          %s429 = scalar_lea.hbm %s5, %s428
          %s431 = sshll.u32 %s421, 4
          %s432 = int_to_ptr.vmem [resolvable:$true] %s431
          %434 = dma.vmem_to_hbm [thread:$0]  %s432, 128, %s429, %s418
        $region44: #{tpu_custom_call.1} parent=39 // pred_fallthru
          _
      $region40: #{tpu_custom_call.1} parent=5 // pred_fallthru
        _
      %p435 = scmp.le.s32.totalorder 2, %s14
      // Predicated region
      $region45: #{tpu_custom_call.1} parent=5 // pred_check
        %p436 = pneg %p435
      $region46: #{tpu_custom_call.1} parent=5 // pred_check_branch
        %438 = sbr.rel (%p436) target = $region48
      $region47: #{tpu_custom_call.1} parent=5 // pred_region
        %s439 = ssub.s32 %s14, 2
        // Predicated region
        $region49: #{tpu_custom_call.1} parent=47 // pred_check
          %p440 = pneg %p153
        $region50: #{tpu_custom_call.1} parent=47 // pred_check_branch
          %442 = sbr.rel (%p440) target = $region52
        $region51: #{tpu_custom_call.1} parent=47 // pred_region
          %s443 = sand.u32 %s138, 1
          %s444 = scalar_lea.sflag [#allocation3], %s443
          %s445 = sand.u32 %s138, 1
          %s446 = smul.addr %s445, 8
          %s447 = scalar_lea.vmem [#allocation2], %s446
          %448 = dma.done %s444, 128
        $region52: #{tpu_custom_call.1} parent=47 // pred_fallthru
          _
      $region48: #{tpu_custom_call.1} parent=5 // pred_fallthru
        _
    $region6: #{tpu_custom_call.1} parent=1 // loop_footer
      %s18 = sadd.s32 1, %s14
    $region7: #{tpu_custom_call.1} parent=1 // loop_footer_branch
      %13 = sbr.rel target = $region3
    $region8: #{tpu_custom_call.1} parent=1 // loop_exit
      _
    %449 = vsyncpa [#allocation3], 1
    %s450 = scalar_lea.sflag [#allocation3], 1
    %451 = vsyncpa %s450, 1

</llo_original>
